<compile_context>
chip_gen: v7x
topology: tpu7x:2x2x1
jax: 0.10.0
libtpu: 0.0.40
codegen_flags: <defaults>
</compile_context>

<pallas_src>
import functools
import math

import jax
import jax.numpy as jnp
from jax import lax
from jax.experimental import pallas as pl
from jax.experimental.pallas import tpu as pltpu


def _round_up(x: int, m: int) -> int:
    return ((x + m - 1) // m) * m


def _vmem_limit(*block_nbytes) -> int:
    """Per-kernel scoped-VMEM budget: 2x (double buffering) + headroom, capped at
    40 MiB (v7x has only 64 MiB physical VMEM per TensorCore)."""
    need = 2 * int(sum(block_nbytes)) + (4 << 20)
    return int(min(max(need, 16 << 20), 40 << 20))


# --------------------------------------------------------------------------------------
# Standalone LayerNorm (torch semantics). Used for the fallback path (d_model larger
# than one k-step) and for the isolated LN correctness check.
# --------------------------------------------------------------------------------------
def _layernorm_kernel(x_ref, alpha_ref, bias_ref, o_ref, *, eps, features):
    x = x_ref[...].astype(jnp.float32)                         # (rows_blk, H)
    mean = jnp.sum(x, axis=-1, keepdims=True) * (1.0 / features)
    d = x - mean
    # Two-pass (centered) variance: avoids E[x^2]-mean^2 cancellation. torch.std is
    # UNBIASED (divide by N-1) and eps is added to the STD.
    var = jnp.sum(d * d, axis=-1, keepdims=True) * (1.0 / (features - 1))
    inv = pl.reciprocal(jnp.sqrt(var) + eps, approx=False)
    o_ref[...] = (alpha_ref[...] * (d * inv) + bias_ref[...]).astype(o_ref.dtype)


def layer_norm(x, alpha, bias, eps=1e-6, max_row_block=512):
    """LayerNorm over the last dim of x (torch semantics). x: (..., H)."""
    orig_shape = x.shape
    H = orig_shape[-1]
    x2d = x.reshape(-1, H)
    rows = x2d.shape[0]

    sub = 16 if x.dtype == jnp.bfloat16 else 8     # dtype-aware sublane granularity
    row_block = min(max_row_block, _round_up(rows, sub))
    rows_pad = _round_up(rows, row_block)
    if rows_pad != rows:
        x2d = jnp.pad(x2d, ((0, rows_pad - rows), (0, 0)))

    alpha2d = alpha.reshape(1, H).astype(jnp.float32)
    bias2d = bias.reshape(1, H).astype(jnp.float32)

    est = _vmem_limit(row_block * H * 4, 2 * H * 4, row_block * H * x.dtype.itemsize)
    out = pl.pallas_call(
        functools.partial(_layernorm_kernel, eps=eps, features=H),
        out_shape=jax.ShapeDtypeStruct((rows_pad, H), x.dtype),
        grid_spec=pltpu.PrefetchScalarGridSpec(
            num_scalar_prefetch=0,
            grid=(rows_pad // row_block,),
            in_specs=[
                pl.BlockSpec((row_block, H), lambda i: (i, 0)),
                pl.BlockSpec((1, H), lambda i: (0, 0)),
                pl.BlockSpec((1, H), lambda i: (0, 0)),
            ],
            out_specs=pl.BlockSpec((row_block, H), lambda i: (i, 0)),
        ),
        compiler_params=pltpu.CompilerParams(
            dimension_semantics=("parallel",), vmem_limit_bytes=est),
    )(x2d, alpha2d, bias2d)
    if rows_pad != rows:
        out = out[:rows]
    return out.reshape(orig_shape)


# --------------------------------------------------------------------------------------
# Tiled matmul with optional fused LayerNorm (on the x tile) and fused
# bias / ReLU / residual epilogue.
# --------------------------------------------------------------------------------------
def _matmul_kernel(*refs, activation, has_bias, has_residual, fuse_ln,
                   ln_eps, ln_features, num_k_steps, mxu_dtype):
    it = iter(refs)
    x_ref = next(it)
    w_ref = next(it)
    ln_a_ref = next(it) if fuse_ln else None
    ln_b_ref = next(it) if fuse_ln else None
    b_ref = next(it) if has_bias else None
    r_ref = next(it) if has_residual else None
    o_ref = next(it)
    acc_ref = next(it) if num_k_steps > 1 else None

    x = x_ref[...]
    if fuse_ln:
        # LN fused into the matmul: the x tile covers the full feature dim (single
        # k-step, no K padding), so the reduction is exact. Two-pass variance.
        xf = x.astype(jnp.float32)
        mean = jnp.sum(xf, axis=-1, keepdims=True) * (1.0 / ln_features)
        d = xf - mean
        var = jnp.sum(d * d, axis=-1, keepdims=True) * (1.0 / (ln_features - 1))
        inv = pl.reciprocal(jnp.sqrt(var) + ln_eps, approx=False)
        x = ln_a_ref[...] * (d * inv) + ln_b_ref[...]          # f32

    dot_dtype = mxu_dtype if mxu_dtype is not None else x_ref.dtype
    lhs = x.astype(dot_dtype)
    rhs = w_ref[...].astype(dot_dtype)
    partial = jnp.dot(lhs, rhs, preferred_element_type=jnp.float32)

    def _epilogue(acc):
        out = acc
        if has_bias:
            out = out + b_ref[...]
        if activation == "relu":
            out = jnp.maximum(out, 0.0)
        if has_residual:        # fused residual add: skips an extra HBM pass
            out = out + r_ref[...].astype(jnp.float32)
        o_ref[...] = out.astype(o_ref.dtype)

    if num_k_steps == 1:
        # Single k-step: no accumulator zero-init / += / copy-back overhead.
        _epilogue(partial)
    else:
        @pl.when(pl.program_id(2) == 0)
        def _():
            acc_ref[...] = jnp.zeros_like(acc_ref)
        acc_ref[...] += partial

        @pl.when(pl.program_id(2) == num_k_steps - 1)
        def _():
            _epilogue(acc_ref[...])


def linear(x, w, b=None, residual=None, activation=None, ln_params=None, ln_eps=1e-6,
           *, tm=512, tn=512, tk=1024, mxu_dtype=None):
    """y = act(LN?(x) @ w + b) [+ residual]. x: (M, K), w: (K, N) (already (in, out))."""
    M, K = x.shape
    Kw, N = w.shape
    assert K == Kw

    # LN fusion only when the whole reduction fits one k-step; otherwise fall back to
    # the standalone LN kernel.
    fuse_ln = (ln_params is not None) and (K <= tk)
    if ln_params is not None and not fuse_ln:
        x = layer_norm(x, ln_params[0], ln_params[1], eps=ln_eps)

    # Full-dim blocks whenever a dim fits the default tile: satisfies the (8,128)
    # constraint ("equal the full array dim") with zero XLA-side padding / slicing.
    tm_ = M if M <= tm else tm
    tn_ = N if N <= tn else tn
    tk_ = K if K <= tk else tk
    Mp, Kp, Np = _round_up(M, tm_), _round_up(K, tk_), _round_up(N, tn_)
    num_k = Kp // tk_

    x_p = x if (Mp, Kp) == (M, K) else jnp.pad(x, ((0, Mp - M), (0, Kp - K)))
    w_c = w.astype(mxu_dtype) if mxu_dtype is not None else w
    w_p = w_c if (Kp, Np) == (K, N) else jnp.pad(w_c, ((0, Kp - K), (0, Np - N)))

    if num_k == 1:
        grid = (Mp // tm_, Np // tn_)
        x_map = lambda i, j: (i, 0)
        w_map = lambda i, j: (0, j)
        p_map = lambda i, j: (0, 0)
        b_map = lambda i, j: (0, j)
        o_map = lambda i, j: (i, j)
        dims = ("parallel", "parallel")
        scratch = []
    else:
        grid = (Mp // tm_, Np // tn_, num_k)
        x_map = lambda i, j, k: (i, k)
        w_map = lambda i, j, k: (k, j)
        p_map = lambda i, j, k: (0, 0)
        b_map = lambda i, j, k: (0, j)
        o_map = lambda i, j, k: (i, j)
        dims = ("parallel", "parallel", "arbitrary")
        scratch = [pltpu.VMEM((tm_, tn_), jnp.float32)]

    inputs = [x_p, w_p]
    in_specs = [pl.BlockSpec((tm_, tk_), x_map), pl.BlockSpec((tk_, tn_), w_map)]

    if fuse_ln:
        a2 = ln_params[0].reshape(1, K).astype(jnp.float32)
        g2 = ln_params[1].reshape(1, K).astype(jnp.float32)
        inputs += [a2, g2]
        in_specs += [pl.BlockSpec((1, tk_), p_map), pl.BlockSpec((1, tk_), p_map)]

    has_bias = b is not None
    if has_bias:
        b2 = b.reshape(1, N).astype(jnp.float32)
        if Np != N:
            b2 = jnp.pad(b2, ((0, 0), (0, Np - N)))
        inputs.append(b2)
        in_specs.append(pl.BlockSpec((1, tn_), b_map))

    has_residual = residual is not None
    if has_residual:
        r_p = residual if (Mp, Np) == (M, N) else \
            jnp.pad(residual, ((0, Mp - M), (0, Np - N)))
        inputs.append(r_p)
        in_specs.append(pl.BlockSpec((tm_, tn_), o_map))

    est = _vmem_limit(tm_ * tk_ * 4, tk_ * tn_ * 4, tm_ * tn_ * 4,
                      tm_ * tn_ * 4 * (1 if has_residual else 0),
                      tm_ * tn_ * 4 * (1 if num_k > 1 else 0))

    out = pl.pallas_call(
        functools.partial(_matmul_kernel, activation=activation, has_bias=has_bias,
                          has_residual=has_residual, fuse_ln=fuse_ln, ln_eps=ln_eps,
                          ln_features=K, num_k_steps=num_k, mxu_dtype=mxu_dtype),
        out_shape=jax.ShapeDtypeStruct((Mp, Np), x.dtype),
        grid_spec=pltpu.PrefetchScalarGridSpec(
            num_scalar_prefetch=0, grid=grid, in_specs=in_specs,
            out_specs=pl.BlockSpec((tm_, tn_), o_map),
            scratch_shapes=scratch),
        compiler_params=pltpu.CompilerParams(
            dimension_semantics=dims, vmem_limit_bytes=est),
    )(*inputs)
    if (Mp, Np) != (M, N):
        out = out[:M, :N]
    return out


# --------------------------------------------------------------------------------------
# Transpose-free multi-head attention: one grid step per batch, packed QKV input,
# per-head matmuls in VMEM, single lane-dense (S, D) output block into (B*S, D).
# --------------------------------------------------------------------------------------
def _attention_kernel(qkv_ref, mb_ref, o_ref, *, num_heads, d_k, scale, mxu_dtype):
    d_model = num_heads * d_k
    qkv = qkv_ref[...].astype(jnp.float32)          # (S, 3*D)  [q | k | v]
    mb = mb_ref[...]                                # (Sm, S) additive mask bias (f32)
    dot_dtype = mxu_dtype if mxu_dtype is not None else jnp.float32

    outs = []
    for hh in range(num_heads):                     # static unroll over heads
        lo = hh * d_k
        # Scale Q before QK^T: S*d_k multiplies instead of S^2.
        q = (qkv[:, lo:lo + d_k] * scale).astype(dot_dtype)
        k = qkv[:, d_model + lo:d_model + lo + d_k].astype(dot_dtype)
        v = qkv[:, 2 * d_model + lo:2 * d_model + lo + d_k].astype(dot_dtype)
        # Contract last dims directly (no materialized K^T).
        s = lax.dot_general(q, k, (((1,), (1,)), ((), ())),
                            preferred_element_type=jnp.float32)        # (S, S)
        s = s + mb                                  # additive mask bias (broadcasts)
        m = jnp.max(s, axis=-1, keepdims=True)
        e = jnp.exp(s - m)
        p = e * pl.reciprocal(jnp.sum(e, axis=-1, keepdims=True), approx=False)
        # TODO(synk): attention-score dropout is identity in eval mode; training-mode
        # dropout (pltpu.prng_seed / prng_random_bits) not implemented.
        outs.append(jnp.dot(p.astype(dot_dtype), v, preferred_element_type=jnp.float32))
    # Single lane-dense store of the merged heads, already in (B*S, D) layout.
    o_ref[...] = jnp.concatenate(outs, axis=-1).astype(o_ref.dtype)


def multi_head_attention(qkv, mask_bias, *, batch, seq, d_model, num_heads,
                         mxu_dtype=None):
    """qkv: (B*S, 3*D) packed [q|k|v]; mask_bias: (B, Sm, S) additive f32 (0 / -1e9).
    Returns (B*S, D) with heads already merged (no transposes anywhere)."""
    d_k = d_model // num_heads
    scale = 1.0 / math.sqrt(d_k)
    Sm = mask_bias.shape[1]

    # TODO(synk): full-S tiles per batch; a flash-style KV-tiled online-softmax path is
    # needed for very long sequences on v7x (scores tile is S^2*4 bytes per head).
    est = _vmem_limit(seq * 3 * d_model * 4, Sm * seq * 4, seq * d_model * 4,
                      2 * seq * seq * 4)
    return pl.pallas_call(
        functools.partial(_attention_kernel, num_heads=num_heads, d_k=d_k,
                          scale=scale, mxu_dtype=mxu_dtype),
        out_shape=jax.ShapeDtypeStruct((batch * seq, d_model), qkv.dtype),
        grid_spec=pltpu.PrefetchScalarGridSpec(
            num_scalar_prefetch=0,
            grid=(batch,),
            in_specs=[
                pl.BlockSpec((seq, 3 * d_model), lambda b: (b, 0)),
                pl.BlockSpec((None, Sm, seq), lambda b: (b, 0, 0)),
            ],
            out_specs=pl.BlockSpec((seq, d_model), lambda b: (b, 0)),
        ),
        compiler_params=pltpu.CompilerParams(
            dimension_semantics=("parallel",), vmem_limit_bytes=est),
    )(qkv, mask_bias)


# --------------------------------------------------------------------------------------
# Full EncoderBlock forward (pre-norm residual connections)
# --------------------------------------------------------------------------------------
def encoder_block_forward(x, src_mask, params, eps=1e-6, mxu_dtype=None):
    B, S, D = x.shape
    h = params["num_heads"]
    x2 = x.reshape(B * S, D)

    # ---- Residual branch 1: x + W_o(Attention(LN1(x))) ----
    # Fused QKV projection (one matmul, 3x less activation read traffic) with LN1
    # computed inside the matmul kernel (no HBM round-trip of normalized activations).
    w_qkv = jnp.concatenate([params["w_q"], params["w_k"], params["w_v"]], axis=1)
    qkv = linear(x2, w_qkv, ln_params=(params["ln1_alpha"], params["ln1_bias"]),
                 ln_eps=eps, mxu_dtype=mxu_dtype)                    # (B*S, 3D)

    Sm = src_mask.shape[2]
    mask_bias = jnp.where(src_mask == 0, -1e9, 0.0).astype(jnp.float32).reshape(B, Sm, S)
    attn = multi_head_attention(qkv, mask_bias, batch=B, seq=S, d_model=D,
                                num_heads=h, mxu_dtype=mxu_dtype)    # (B*S, D)
    x2 = linear(attn, params["w_o"], residual=x2, mxu_dtype=mxu_dtype)

    # ---- Residual branch 2: x + FFN(LN2(x)) ----
    hid = linear(x2, params["w1"], b=params["b1"], activation="relu",
                 ln_params=(params["ln2_alpha"], params["ln2_bias"]),
                 ln_eps=eps, mxu_dtype=mxu_dtype)
    # TODO(synk): FFN / residual dropout is identity in eval mode (not implemented).
    x2 = linear(hid, params["w2"], b=params["b2"], residual=x2, mxu_dtype=mxu_dtype)
    return x2.reshape(B, S, D)


# --------------------------------------------------------------------------------------
# Pure-JAX reference (torch semantics) + demo
# --------------------------------------------------------------------------------------
def _layernorm_ref(x, alpha, bias, eps=1e-6):
    mean = jnp.mean(x, axis=-1, keepdims=True)
    std = jnp.sqrt(jnp.sum((x - mean) ** 2, axis=-1, keepdims=True) / (x.shape[-1] - 1))
    return alpha * (x - mean) / (std + eps) + bias


def _encoder_block_ref(x, src_mask, params, eps=1e-6):
    B, S, D = x.shape
    h = params["num_heads"]
    d_k = D // h
    xn = _layernorm_ref(x, params["ln1_alpha"], params["ln1_bias"], eps)
    q, k, v = (jnp.matmul(xn, params[w]) for w in ("w_q", "w_k", "w_v"))

    def split(t):
        return t.reshape(B, S, h, d_k).transpose(0, 2, 1, 3)

    q, k, v = split(q), split(k), split(v)
    scores = jnp.matmul(q, jnp.swapaxes(k, -2, -1)) / math.sqrt(d_k)
    scores = jnp.where(src_mask == 0, -1e9, scores)
    p = jax.nn.softmax(scores, axis=-1)
    a = jnp.matmul(p, v).transpose(0, 2, 1, 3).reshape(B, S, D)
    x = x + jnp.matmul(a, params["w_o"])

    xn = _layernorm_ref(x, params["ln2_alpha"], params["ln2_bias"], eps)
    ffn = jnp.matmul(jnp.maximum(jnp.matmul(xn, params["w1"]) + params["b1"], 0.0),
                     params["w2"]) + params["b2"]
    return x + ffn


if __name__ == "__main__":
    key = jax.random.PRNGKey(0)
    B, S, D = 2, 8, 32           # (batch, seq, d_model)
    NUM_HEADS, D_FF = 4, 64
    keys = jax.random.split(key, 8)

    x = jax.random.normal(keys[0], (B, S, D), dtype=jnp.float32)
    w_scale = 1.0 / math.sqrt(D)
    params = {
        "num_heads": NUM_HEADS,
        "ln1_alpha": jnp.ones((D,), jnp.float32),    # nn.Parameter(torch.ones)
        "ln1_bias": jnp.zeros((D,), jnp.float32),    # nn.Parameter(torch.zeros)
        "ln2_alpha": jnp.ones((D,), jnp.float32),
        "ln2_bias": jnp.zeros((D,), jnp.float32),
        # Weights stored as (in, out) so y = x @ W (torch nn.Linear stores (out, in)).
        "w_q": jax.random.normal(keys[1], (D, D), jnp.float32) * w_scale,
        "w_k": jax.random.normal(keys[2], (D, D), jnp.float32) * w_scale,
        "w_v": jax.random.normal(keys[3], (D, D), jnp.float32) * w_scale,
        "w_o": jax.random.normal(keys[4], (D, D), jnp.float32) * w_scale,
        "w1": jax.random.normal(keys[5], (D, D_FF), jnp.float32) * w_scale,
        "b1": jax.random.normal(keys[6], (D_FF,), jnp.float32) * 0.1,
        "w2": jax.random.normal(keys[7], (D_FF, D), jnp.float32) * (1.0 / math.sqrt(D_FF)),
        "b2": jnp.zeros((D,), jnp.float32),
    }
    # src_mask: (B, 1, 1, S), 0 = masked. Mask the last two positions of batch 1.
    src_mask = jnp.ones((B, 1, 1, S), jnp.int32).at[1, 0, 0, -2:].set(0)

    out = encoder_block_forward(x, src_mask, params)
    out = jax.block_until_ready(out)
    assert out.shape == (B, S, D)

    # (1) Tight check of the standalone LayerNorm kernel (no MXU precision slack).
    ln_out = jax.block_until_ready(layer_norm(x, params["ln1_alpha"], params["ln1_bias"]))
    ln_ref = _layernorm_ref(x, params["ln1_alpha"], params["ln1_bias"])
    assert jnp.allclose(ln_out, ln_ref, atol=1e-5, rtol=1e-5), \
        float(jnp.max(jnp.abs(ln_out - ln_ref)))

    # (2) Full encoder block vs pure-JAX reference. Tolerance leaves room for MXU
    #     f32-via-bf16-pass rounding differences vs the XLA reference matmuls.
    with jax.default_matmul_precision("highest"):
        ref = _encoder_block_ref(x, src_mask, params)
    assert jnp.allclose(out, ref, atol=2e-2, rtol=2e-2), \
        float(jnp.max(jnp.abs(out - ref)))

    print("KERNEL_OK")
</pallas_src>

<mosaic_0001>
module attributes {stable_mosaic.version = 11 : i64} {
  func.func @_matmul_kernel(%arg0: i32, %arg1: i32, %arg2: memref<16x32xf32, #tpu.memory_space<vmem>>, %arg3: memref<32x96xf32, #tpu.memory_space<vmem>>, %arg4: memref<1x32xf32, #tpu.memory_space<vmem>>, %arg5: memref<1x32xf32, #tpu.memory_space<vmem>>, %arg6: memref<16x96xf32, #tpu.memory_space<vmem>>) attributes {dimension_semantics = [#tpu.dimension_semantics<parallel>, #tpu.dimension_semantics<parallel>], iteration_bounds = array<i64: 1, 1>, scalar_prefetch = 0 : i64, scratch_operands = 0 : i64, tpu.core_type = #tpu.core_type<tc>, window_params = [{transform_indices = @transform_0, window_bounds = array<i64: 16, 32>}, {transform_indices = @transform_1, window_bounds = array<i64: 32, 96>}, {pipeline_mode = #tpu.pipeline_mode<synchronous>, transform_indices = @transform_2, window_bounds = array<i64: 1, 32>}, {pipeline_mode = #tpu.pipeline_mode<synchronous>, transform_indices = @transform_3, window_bounds = array<i64: 1, 32>}, {transform_indices = @transform_4, window_bounds = array<i64: 16, 96>}]} {
    %c0 = arith.constant 0 : index
    %c0_0 = arith.constant 0 : index
    %0 = vector.load %arg2[%c0, %c0_0] : memref<16x32xf32, #tpu.memory_space<vmem>>, vector<16x32xf32>
    %cst = arith.constant dense<0.000000e+00> : vector<16xf32>
    %1 = vector.multi_reduction <add>, %0, %cst [1] : vector<16x32xf32> to vector<16xf32>
    %2 = vector.shape_cast %1 : vector<16xf32> to vector<16x1xf32>
    %cst_1 = arith.constant 3.125000e-02 : f32
    %3 = vector.broadcast %cst_1 : f32 to vector<16x1xf32>
    %4 = arith.mulf %2, %3 : vector<16x1xf32>
    %5 = vector.broadcast %4 : vector<16x1xf32> to vector<16x32xf32>
    %6 = arith.subf %0, %5 : vector<16x32xf32>
    %7 = arith.mulf %6, %6 : vector<16x32xf32>
    %cst_2 = arith.constant dense<0.000000e+00> : vector<16xf32>
    %8 = vector.multi_reduction <add>, %7, %cst_2 [1] : vector<16x32xf32> to vector<16xf32>
    %9 = vector.shape_cast %8 : vector<16xf32> to vector<16x1xf32>
    %cst_3 = arith.constant 0.0322580636 : f32
    %10 = vector.broadcast %cst_3 : f32 to vector<16x1xf32>
    %11 = arith.mulf %9, %10 : vector<16x1xf32>
    %12 = math.sqrt %11 : vector<16x1xf32>
    %cst_4 = arith.constant 9.99999997E-7 : f32
    %13 = vector.broadcast %cst_4 : f32 to vector<16x1xf32>
    %14 = arith.addf %12, %13 : vector<16x1xf32>
    %15 = tpu.reciprocal %14 : vector<16x1xf32> -> vector<16x1xf32>
    %c0_5 = arith.constant 0 : index
    %c0_6 = arith.constant 0 : index
    %16 = vector.load %arg4[%c0_5, %c0_6] : memref<1x32xf32, #tpu.memory_space<vmem>>, vector<1x32xf32>
    %17 = vector.broadcast %15 : vector<16x1xf32> to vector<16x32xf32>
    %18 = arith.mulf %6, %17 : vector<16x32xf32>
    %19 = vector.broadcast %16 : vector<1x32xf32> to vector<16x32xf32>
    %20 = arith.mulf %19, %18 : vector<16x32xf32>
    %c0_7 = arith.constant 0 : index
    %c0_8 = arith.constant 0 : index
    %21 = vector.load %arg5[%c0_7, %c0_8] : memref<1x32xf32, #tpu.memory_space<vmem>>, vector<1x32xf32>
    %22 = vector.broadcast %21 : vector<1x32xf32> to vector<16x32xf32>
    %23 = arith.addf %20, %22 : vector<16x32xf32>
    %c0_9 = arith.constant 0 : index
    %c0_10 = arith.constant 0 : index
    %24 = vector.load %arg3[%c0_9, %c0_10] : memref<32x96xf32, #tpu.memory_space<vmem>>, vector<32x96xf32>
    %cst_11 = arith.constant dense<0.000000e+00> : vector<16x96xf32>
    %25 = tpu.matmul %23, %24, %cst_11 {dimension_numbers = #tpu.dot_dimension_numbers<[1], [0], [0], [1], [0, 0, 1, 1], [], []>} : vector<16x32xf32>, vector<32x96xf32>, vector<16x96xf32> -> vector<16x96xf32>
    %c0_12 = arith.constant 0 : index
    %c0_13 = arith.constant 0 : index
    %26 = vector.load %arg6[%c0_12, %c0_13] : memref<16x96xf32, #tpu.memory_space<vmem>>, vector<16x96xf32>
    tpu.vector_store %arg6[%c0_12, %c0_13], %25 {strides = array<i32>} : memref<16x96xf32, #tpu.memory_space<vmem>>, vector<16x96xf32>,
    return
  }
  func.func @transform_0(%arg0: i32, %arg1: i32) -> (i32, i32) {
    %c0_i32 = arith.constant 0 : i32
    %c0_i32_0 = arith.constant 0 : i32
    return %arg0, %c0_i32 : i32, i32
  }
  func.func @transform_1(%arg0: i32, %arg1: i32) -> (i32, i32) {
    %c0_i32 = arith.constant 0 : i32
    %c0_i32_0 = arith.constant 0 : i32
    return %c0_i32, %arg1 : i32, i32
  }
  func.func @transform_2(%arg0: i32, %arg1: i32) -> (i32, i32) {
    %c0_i32 = arith.constant 0 : i32
    %c0_i32_0 = arith.constant 0 : i32
    %c0_i32_1 = arith.constant 0 : i32
    return %c0_i32, %c0_i32_0 : i32, i32
  }
  func.func @transform_3(%arg0: i32, %arg1: i32) -> (i32, i32) {
    %c0_i32 = arith.constant 0 : i32
    %c0_i32_0 = arith.constant 0 : i32
    %c0_i32_1 = arith.constant 0 : i32
    return %c0_i32, %c0_i32_0 : i32, i32
  }
  func.func @transform_4(%arg0: i32, %arg1: i32) -> (i32, i32) {
    %c0_i32 = arith.constant 0 : i32
    return %arg0, %arg1 : i32, i32
  }
}

</mosaic_0001>

<llo_original>
// kernel: tpu_custom_call.1
$region0: #{tpu_custom_call.1}
  #allocation0 [shape = 'u32[]', space=smem, size = 0x4, offset = 0x4, fixed_abs, tag = 'smem constant byte address 0x4 - core index']
  #allocation1 [shape = 'u32[144,128]{1,0:T(1,128)}', space=vmem, size = 0x12000, scoped, tag = 'internal scratch']
  %s0 = inlined_call_operand.hbm [shape: f32[16,32], index: 0, kind: input, shape index: {}]
  %s1 = inlined_call_operand.hbm [shape: f32[32,96], index: 1, kind: input, shape index: {}]
  %s2 = inlined_call_operand.vmem [shape: f32[1,32], index: 2, kind: input, shape index: {}]
  %s3 = inlined_call_operand.vmem [shape: f32[1,32], index: 3, kind: input, shape index: {}]
  %s4 = inlined_call_operand.hbm [shape: f32[16,96], index: 4, kind: output, shape index: {}]
  %s5 = sld [smem:[#allocation0]]
  $region34: #{tpu_custom_call.1} parent=0
    _
  %s7 = ssub.s32 1, %s5
  %s8 = scalar_select 0, %s7, %s5
  $region1: #{tpu_custom_call.1} parent=0
    #allocation2 [shape = 'u8[8192]{0}', space=vmem, size = 0x2000, scoped, tag = 'input window, operand 0, single buffered']
    #allocation3 [shape = 's32[1]{0}', space=sflag, size = 0x4, scoped, tag = 'scoped memory for tpu_custom_call.1']
    #allocation4 [shape = 's32[1]{0}', space=sflag, size = 0x4, scoped, tag = 'scoped memory for tpu_custom_call.1']
    #allocation5 [shape = 'u8[16384]{0}', space=vmem, size = 0x4000, scoped, tag = 'input window, operand 1, single buffered']
    #allocation6 [shape = 's32[1]{0}', space=sflag, size = 0x4, scoped, tag = 'scoped memory for tpu_custom_call.1']
    #allocation7 [shape = 'u8[8192]{0}', space=vmem, size = 0x2000, scoped, tag = 'output window, operand 0, single buffered']
    %9 = vsyncpa [#allocation3], 0
    %10 = vsyncpa [#allocation6], 0
    %11 = vsyncpa [#allocation4], 0
    // Predicated region
    $region2: #{tpu_custom_call.1} parent=1 // pred_check
      _
    $region3: #{tpu_custom_call.1} parent=1 // pred_check_branch
      %13 = sbr.rel (0) target = $region5
    $region4: #{tpu_custom_call.1} parent=1 // pred_region
      %s15 = ssub.s32 256, 256
      %16 = vsyncadd [#allocation3], %s15
      %s17 = sshll.u32 [#allocation2], 4
      %s18 = int_to_ptr.vmem [resolvable:$true] %s17
      %23 = dma.hbm_to_vmem [thread:$0]  %s0, 256, %s18, [#allocation3], 128, 128, 8
    $region5: #{tpu_custom_call.1} parent=1 // pred_fallthru
      _
    // Predicated region
    $region6: #{tpu_custom_call.1} parent=1 // pred_check
      _
    $region7: #{tpu_custom_call.1} parent=1 // pred_check_branch
      %25 = sbr.rel (0) target = $region9
    $region8: #{tpu_custom_call.1} parent=1 // pred_region
      %s27 = ssub.s32 512, 512
      %28 = vsyncadd [#allocation6], %s27
      %s29 = sshll.u32 [#allocation5], 4
      %s30 = int_to_ptr.vmem [resolvable:$true] %s29
      %35 = dma.hbm_to_vmem [thread:$0]  %s1, 512, %s30, [#allocation6], 128, 128, 8
    $region9: #{tpu_custom_call.1} parent=1 // pred_fallthru
      _
    // Predicated region
    $region10: #{tpu_custom_call.1} parent=1 // pred_check
      _
    $region11: #{tpu_custom_call.1} parent=1 // pred_check_branch
      %37 = sbr.rel (0) target = $region13
    $region12: #{tpu_custom_call.1} parent=1 // pred_region
      _
    $region13: #{tpu_custom_call.1} parent=1 // pred_fallthru
      _
    // Predicated region
    $region14: #{tpu_custom_call.1} parent=1 // pred_check
      _
    $region15: #{tpu_custom_call.1} parent=1 // pred_check_branch
      %39 = sbr.rel (0) target = $region17
    $region16: #{tpu_custom_call.1} parent=1 // pred_region
      _
    $region17: #{tpu_custom_call.1} parent=1 // pred_fallthru
      _
    // Predicated region
    $region18: #{tpu_custom_call.1} parent=1 // pred_check
      _
    $region19: #{tpu_custom_call.1} parent=1 // pred_check_branch
      %41 = sbr.rel (0) target = $region21
    $region20: #{tpu_custom_call.1} parent=1 // pred_region
      %42 = dma.done [#allocation3], 256
    $region21: #{tpu_custom_call.1} parent=1 // pred_fallthru
      _
    // Predicated region
    $region22: #{tpu_custom_call.1} parent=1 // pred_check
      _
    $region23: #{tpu_custom_call.1} parent=1 // pred_check_branch
      %44 = sbr.rel (0) target = $region25
    $region24: #{tpu_custom_call.1} parent=1 // pred_region
      %45 = dma.done [#allocation6], 512
    $region25: #{tpu_custom_call.1} parent=1 // pred_fallthru
      _
    %v46 = vld [vmem:[#allocation2] sm:$0xff]
    %v47 = vld [vmem:[#allocation2 + $0x8] sm:$0xff]
    %vm48 = vcmask 261120
    %v49 = vsel %vm48, %v46, 0.0
    %50 = vadd.xlane.f32.xlu0 %v49
    %v51 = vpop.xlane.xlu0 %50
    %v52 = vsel %vm48, %v47, 0.0
    %53 = vadd.xlane.f32.xlu0 %v52
    %v54 = vpop.xlane.xlu0 %53
    %v55 = vmul.f32 %v51, 0.03125
    %v56 = vmul.f32 %v54, 0.03125
    %v57 = vsub.f32 %v46, %v55
    %v58 = vsub.f32 %v47, %v56
    %v59 = vmul.f32 %v57, %v57
    %v60 = vmul.f32 %v58, %v58
    %v61 = vsel %vm48, %v59, 0.0
    %62 = vadd.xlane.f32.xlu0 %v61
    %v63 = vpop.xlane.xlu0 %62
    %v64 = vsel %vm48, %v60, 0.0
    %65 = vadd.xlane.f32.xlu0 %v64
    %v66 = vpop.xlane.xlu0 %65
    %v67 = vmul.f32 %v63, 0.032258064
    %v68 = vmul.f32 %v66, 0.032258064
    %v69 = vrsqrt.pop %v67
    %v70 = vmul.f32 %v67, %v69
    %vm71 = vcmp.eq.f32.partialorder %v67, inf
    %v72 = vsel %vm71, %v67, %v70
    %vm73 = vcmp.eq.f32.partialorder %v67, 0.0
    %v74 = vand.u32 %v67, 2147483648
    %v75 = vsel %vm73, %v74, %v72
    %v76 = vrsqrt.pop %v68
    %v77 = vmul.f32 %v68, %v76
    %vm78 = vcmp.eq.f32.partialorder %v68, inf
    %v79 = vsel %vm78, %v68, %v77
    %vm80 = vcmp.eq.f32.partialorder %v68, 0.0
    %v81 = vand.u32 %v68, 2147483648
    %v82 = vsel %vm80, %v81, %v79
    %v83 = vadd.f32 %v75, 1e-06
    %v84 = vadd.f32 %v82, 1e-06
    %v85 = vrcp.pop %v83
    %v86 = vrcp.pop %v84
    %v87 = vld [vmem:[%s2] sm:$0x1]
    %v88 = vmul.f32 %v57, %v85
    %v89 = vmul.f32 %v58, %v86
    %v91 = vlaneseq
    %v92 = vshrl.u32 %v91, 7
    %v93 = vsub.s32 0, %v92
    %v94 = vrot.slane %v87, %v93
    %v96 = vmul.f32 %v94, %v88
    %v97 = vmul.f32 %v94, %v89
    %v98 = vld [vmem:[%s3] sm:$0x1]
    %v100 = vlaneseq
    %v101 = vshrl.u32 %v100, 7
    %v102 = vsub.s32 0, %v101
    %v103 = vrot.slane %v98, %v102
    %v105 = vadd.f32 %v96, %v103
    %v106 = vadd.f32 %v97, %v103
    %v107 = vld [vmem:[#allocation5] sm:$0xff]
    %v108 = vld [vmem:[#allocation5 + $0x8] sm:$0xff]
    %v109 = vld [vmem:[#allocation5 + $0x10] sm:$0xff]
    %v110 = vld [vmem:[#allocation5 + $0x18] sm:$0xff]
    %v112 = vsel %vm48, %v105, 0
    %v115 = vsel %vm48, %v106, 0
    %117 = vmatprep.subr.mxu0 0.0
    %118 = vmatpush1.msra.mxu0 %v107
    %119 = vmatprep.subr.mxu0 0.0
    %120 = vmatpush1.msra.mxu0 %v108
    %121 = vmatprep.subr.mxu0 0.0
    %122 = vmatpush1.msra.mxu0 %v109
    %123 = vmatprep.subr.mxu0 0.0
    %124 = vmatpush1.msra.mxu0 %v110
    %125 = vmatprep.subr.mxu0 0.0
    %126 = vmatpush1.msra.mxu0 0.0
    %127 = vmatprep.subr.mxu0 0.0
    %128 = vmatpush1.msra.mxu0 0.0
    %129 = vmatprep.subr.mxu0 0.0
    %130 = vmatpush1.msra.mxu0 0.0
    %131 = vmatprep.subr.mxu0 0.0
    %132 = vmatpush1.msra.mxu0 0.0
    %133 = vmatprep.subr.mxu0 0.0
    %134 = vmatpush1.msra.mxu0 0.0
    %135 = vmatprep.subr.mxu0 0.0
    %136 = vmatpush1.msra.mxu0 0.0
    %137 = vmatprep.subr.mxu0 0.0
    %138 = vmatpush1.msra.mxu0 0.0
    %139 = vmatprep.subr.mxu0 0.0
    %140 = vmatpush1.msra.mxu0 0.0
    %141 = vmatprep.subr.mxu0 0.0
    %142 = vmatpush1.msra.mxu0 0.0
    %143 = vmatprep.subr.mxu0 0.0
    %144 = vmatpush1.msra.mxu0 0.0
    %145 = vmatprep.subr.mxu0 0.0
    %146 = vmatpush1.msra.mxu0 0.0
    %147 = vmatprep.subr.mxu0 0.0
    %148 = vmatpush1.msra.mxu0 0.0
    %149 = vmatprep.subr.mxu0 0.0
    %150 = vmatpush1.msra.mxu0 0.0
    %151 = vmatprep.subr.mxu0 0.0
    %152 = vmatpush1.msra.mxu0 0.0
    %153 = vmatprep.subr.mxu0 0.0
    %154 = vmatpush1.msra.mxu0 0.0
    %155 = vmatprep.subr.mxu0 0.0
    %156 = vmatpush1.msra.mxu0 0.0
    %157 = vmatprep.subr.mxu0 0.0
    %158 = vmatpush1.msra.mxu0 0.0
    %159 = vmatprep.subr.mxu0 0.0
    %160 = vmatpush1.msra.mxu0 0.0
    %161 = vmatprep.subr.mxu0 0.0
    %162 = vmatpush1.msra.mxu0 0.0
    %163 = vmatprep.subr.mxu0 0.0
    %164 = vmatpush1.msra.mxu0 0.0
    %165 = vmatprep.subr.mxu0 0.0
    %166 = vmatpush1.msra.mxu0 0.0
    %167 = vmatprep.subr.mxu0 0.0
    %168 = vmatpush1.msra.mxu0 0.0
    %169 = vmatprep.subr.mxu0 0.0
    %170 = vmatpush1.msra.mxu0 0.0
    %171 = vmatprep.subr.mxu0 0.0
    %172 = vmatpush1.msra.mxu0 0.0
    %173 = vmatprep.subr.mxu0 0.0
    %174 = vmatpush1.msra.mxu0 0.0
    %175 = vmatprep.subr.mxu0 0.0
    %176 = vmatpush1.msra.mxu0 0.0
    %177 = vmatprep.subr.mxu0 0.0
    %178 = vmatpush1.msra.mxu0 0.0
    %179 = vmatprep.subr.mxu0 0.0
    %180 = vmatpush1.msra.mxu0 0.0
    %181 = vmatprep.mubr.f32.mxu0 0.0
    %182 = vmatmul.mubr.f32.gmra.mrb[0].mxu0 %v112
    %v183 = vpop.f32.mrb[0].mxu0
    %v184 = vadd.f32 0.0, %v183
    %v185 = vpop.f32.mrb[0].mxu0
    %186 = vmatprep.mubr.f32.mxu0 0.0
    %187 = vmatmul.mubr.f32.gmra.mrb[0].mxu0 %v115
    %v188 = vpop.f32.mrb[0].mxu0
    %v189 = vadd.f32 0.0, %v188
    %v190 = vpop.f32.mrb[0].mxu0
    %191 = vdwg.mxu0
    %vm192 = vcmask 785408
    %193 = vst.msk [vmem:[#allocation7] sm:$0xff] %vm192, %v184
    %194 = vst.msk [vmem:[#allocation7 + $0x8] sm:$0xff] %vm192, %v189
    // Predicated region
    $region26: #{tpu_custom_call.1} parent=1 // pred_check
      _
    $region27: #{tpu_custom_call.1} parent=1 // pred_check_branch
      %196 = sbr.rel (0) target = $region29
    $region28: #{tpu_custom_call.1} parent=1 // pred_region
      %s198 = ssub.s32 256, 256
      %199 = vsyncadd [#allocation4], %s198
      %s200 = sshll.u32 [#allocation7], 4
      %s201 = int_to_ptr.vmem [resolvable:$true] %s200
      %206 = dma.vmem_to_hbm [thread:$0]  %s201, 256, %s4, [#allocation4], 128, 128, 8
    $region29: #{tpu_custom_call.1} parent=1 // pred_fallthru
      _
    // Predicated region
    $region30: #{tpu_custom_call.1} parent=1 // pred_check
      _
    $region31: #{tpu_custom_call.1} parent=1 // pred_check_branch
      %208 = sbr.rel (0) target = $region33
    $region32: #{tpu_custom_call.1} parent=1 // pred_region
      %209 = dma.done [#allocation4], 256
    $region33: #{tpu_custom_call.1} parent=1 // pred_fallthru
      _
    %210 = vsyncpa [#allocation3], 1
    %211 = vsyncpa [#allocation6], 1
    %212 = vsyncpa [#allocation4], 1

</llo_original>
